<compile_context>
chip_gen: v7x
topology: tpu7x:2x2x1
jax: 0.10.0
libtpu: 0.0.40
codegen_flags: <defaults>
</compile_context>

<pallas_src>
import jax
import jax.numpy as jnp
from jax.experimental import pallas as pl
from jax.experimental.pallas import tpu as pltpu

_MIB = 1024 * 1024


def _round_up(v, m):
    return ((v + m - 1) // m) * m


def _vmem_capacity_bytes():
    """Physical VMEM per TensorCore; conservative 64 MiB (v7x) if unknown."""
    try:
        cap = getattr(pltpu.get_tpu_info(), "vmem_capacity_bytes", None)
        if cap:
            return int(cap)
    except Exception:
        pass
    return 64 * _MIB


def _choose_block_channels(B, C, L, itemsize, align, block_budget, inflight_cap):
    """Channel tile size: a divisor of C, multiple of `align`, sized for VMEM."""
    divisors = [d for d in range(align, C + 1, align) if C % d == 0]
    bytes_per_chan = max(1, L * itemsize)

    def in_flight(t):  # double-buffered x + out tiles plus both double-buffered halos
        return (4 * t + 4 * align) * bytes_per_chan

    feasible = [d for d in divisors if in_flight(d) <= inflight_cap]
    if not feasible:
        # TODO(synk): extreme L -- even one align-channel tile overflows VMEM; would
        # need an L-tiled two-pass (mean kernel + scale kernel) design.
        feasible = [divisors[0]]

    # 1) Largest tile within the per-block byte budget (amortizes the ~0.35us/step
    #    grid overhead and keeps DMAs long).  No artificial 512-channel cap.
    within = [d for d in feasible if d * bytes_per_chan <= block_budget]
    tc = max(within) if within else min(feasible)
    # 2) Bound halo re-reads (2*align extra channels per tile) to <= ~25%:
    #    keep tc >= 64 whenever a feasible divisor allows it.
    floor = min(max(feasible), 64 if C >= 64 else align)
    if tc < floor:
        tc = min(d for d in feasible if d >= floor)
    # 3) Enough grid steps for pipelining / megacore sharding: aim for B*nc >= 8,
    #    never dropping below the halo floor.
    while B * (C // tc) < 8:
        smaller = [d for d in feasible if floor <= d < tc]
        if not smaller:
            break
        tc = max(smaller)
    return tc


def _eca_kernel(w_ref, b_ref, x_ref, xl_ref, xr_ref, o_ref):
    """One (batch, channel-tile) grid step.

    w_ref: (1, K) conv taps (SMEM, fp32); b_ref: (1, 1) conv bias (SMEM, fp32)
    x_ref/o_ref: (1, TC, L) main tile; xl_ref/xr_ref: (1, HALO, L) halo windows.
    """
    ci = pl.program_id(1)
    nc = pl.num_programs(1)
    ksize = w_ref.shape[1]
    pad = (ksize - 1) // 2
    halo = xl_ref.shape[1]
    tc = x_ref.shape[1]

    x = x_ref[...]                                                         # (1, TC, L)
    # Pooled means in fp32; channels kept on the sublane axis ((1, c, 1) layout) so
    # the final gate broadcast over L needs no lane<->sublane relayout.
    m = jnp.mean(x, axis=-1, keepdims=True, dtype=jnp.float32)             # (1, TC, 1)
    ml = jnp.mean(xl_ref[...], axis=-1, keepdims=True, dtype=jnp.float32)  # (1, HALO, 1)
    mr = jnp.mean(xr_ref[...], axis=-1, keepdims=True, dtype=jnp.float32)  # (1, HALO, 1)

    # Outer-border halos are zeroed => Conv1d zero-padding semantics.
    ml = jnp.where(ci > 0, ml, 0.0)
    mr = jnp.where(ci < nc - 1, mr, 0.0)

    mpad = jnp.concatenate([ml, m, mr], axis=1)          # (1, HALO + TC + HALO, 1)
    acc = jnp.zeros((1, tc, 1), jnp.float32) + b_ref[0, 0]
    for k in range(ksize):
        s = k - pad                                      # out[c] += w[k] * mean[c + s]
        acc = acc + w_ref[0, k] * mpad[:, halo + s:halo + s + tc, :]

    gate = jax.nn.sigmoid(acc).astype(x.dtype)           # (1, TC, 1)
    o_ref[...] = (x * gate).astype(o_ref.dtype)


def eca_attention_1d(x, weight, bias, *, kernel_size=3, block_channels=None):
    """ECAAttention1D forward. x: (B, C, L); weight: (K,) conv taps; bias: () bias."""
    if kernel_size % 2 != 1:
        raise ValueError("ECAAttention1D requires an odd kernel_size "
                         "(PyTorch Conv1d 'same'-style padding).")
    B, C, L = x.shape
    pad = (kernel_size - 1) // 2
    itemsize = jnp.dtype(x.dtype).itemsize
    align = max(8, 32 // itemsize)               # packed sublane quantum per dtype
    halo = max(align, _round_up(pad, align))     # halo window (channels) per side

    # Generation-aware VMEM policy (conservative fallback if the query is unavailable).
    vmem_cap = _vmem_capacity_bytes()
    vmem_limit = max(32 * _MIB, min(96 * _MIB, vmem_cap - 8 * _MIB))
    block_budget = min(16 * _MIB, vmem_limit // 5)
    inflight_cap = vmem_limit - 4 * _MIB

    # Zero-pad the channel axis to a multiple of the halo quantum: padded channels
    # have zero pooled mean (== Conv1d zero padding at the top border) and their
    # outputs are sliced off, so semantics are preserved.  Costs one extra HBM copy
    # of x, only paid for awkward C.
    Cp = max(halo, _round_up(C, halo))
    xp = x if Cp == C else jnp.pad(x, ((0, 0), (0, Cp - C), (0, 0)))

    if block_channels is None:
        tc = _choose_block_channels(B, Cp, L, itemsize, halo, block_budget, inflight_cap)
    else:
        tc = int(block_channels)
        if Cp % tc != 0 or tc % halo != 0:
            raise ValueError(f"block_channels={tc} must divide padded C={Cp} and be a "
                             f"multiple of the halo quantum {halo}.")

    nc = Cp // tc
    halo_blocks = tc // halo
    last_halo_block = Cp // halo - 1

    # Make sure the scoped limit covers the chosen working set (best effort, HW-capped).
    needed = (4 * tc + 4 * halo) * L * itemsize + 2 * _MIB
    vmem_limit = min(max(vmem_limit, needed), vmem_cap)

    w2d = jnp.asarray(weight, jnp.float32).reshape(1, kernel_size)
    b2d = jnp.asarray(bias, jnp.float32).reshape(1, 1)

    def main_map(b, ci):
        return (b, ci, 0)

    def left_map(b, ci):   # window just before the tile; clamped, masked at ci == 0
        return (b, jnp.maximum(ci * halo_blocks - 1, 0), 0)

    def right_map(b, ci):  # window just after the tile; clamped, masked at ci == nc-1
        return (b, jnp.minimum((ci + 1) * halo_blocks, last_halo_block), 0)

    out = pl.pallas_call(
        _eca_kernel,
        out_shape=jax.ShapeDtypeStruct((B, Cp, L), x.dtype),
        grid=(B, nc),
        in_specs=[
            pl.BlockSpec(memory_space=pltpu.MemorySpace.SMEM),   # conv taps (1, K)
            pl.BlockSpec(memory_space=pltpu.MemorySpace.SMEM),   # conv bias (1, 1)
            pl.BlockSpec((1, tc, L), main_map),                  # x main tile
            pl.BlockSpec((1, halo, L), left_map),                # left halo window
            pl.BlockSpec((1, halo, L), right_map),               # right halo window
        ],
        out_specs=pl.BlockSpec((1, tc, L), main_map),
        compiler_params=pltpu.CompilerParams(
            dimension_semantics=("parallel", "parallel"),
            vmem_limit_bytes=int(vmem_limit)),
        # NOTE: no input_output_aliases -- halo windows read neighbor blocks that
        # aliasing would have already overwritten.
    )(w2d, b2d, xp, xp, xp)

    return out if Cp == C else out[:, :C, :]


def _reference(x, weight, bias, kernel_size=3):
    # pure-JAX reference of the PyTorch forward
    y = jnp.mean(x, axis=-1)                                   # (B, C)
    pad = (kernel_size - 1) // 2
    yp = jnp.pad(y, ((0, 0), (pad, pad)))
    C = x.shape[1]
    conv = sum(weight[k] * yp[:, k:k + C] for k in range(kernel_size)) + bias
    gate = jax.nn.sigmoid(conv)                                # (B, C)
    return x * gate[:, :, None]


if __name__ == "__main__":
    key = jax.random.PRNGKey(0)
    kx, kw, kx2, kx3 = jax.random.split(key, 4)

    kernel_size = 3
    # Deterministic "kaiming_normal(mode=fan_out)"-style init for Conv1d(1,1,3):
    # fan_out = out_channels * kernel_size = 3, std = sqrt(2 / fan_out); bias = 0.
    std = (2.0 / kernel_size) ** 0.5
    weight = std * jax.random.normal(kw, (kernel_size,), dtype=jnp.float32)
    bias = jnp.zeros((), dtype=jnp.float32)

    # Case 1: small shape, single channel tile (nc == 1; both halos masked out).
    B, C, L = 2, 8, 16
    x = jax.random.normal(kx, (B, C, L), dtype=jnp.float32)
    out = jax.block_until_ready(
        eca_attention_1d(x, weight, bias, kernel_size=kernel_size))
    ref = _reference(x, weight, bias, kernel_size)
    assert out.shape == (B, C, L)
    assert jnp.allclose(out, ref, atol=1e-5, rtol=1e-5)

    # Case 2: forces the multi-tile halo path: C=32 split into tiles of 16.
    B2, C2, L2 = 2, 32, 128
    x2 = jax.random.normal(kx2, (B2, C2, L2), dtype=jnp.float32)
    out2 = jax.block_until_ready(
        eca_attention_1d(x2, weight, bias, kernel_size=kernel_size,
                         block_channels=16))
    ref2 = _reference(x2, weight, bias, kernel_size)
    assert out2.shape == (B2, C2, L2)
    assert jnp.allclose(out2, ref2, atol=1e-5, rtol=1e-5)

    # Case 3: C not a multiple of the sublane quantum -> wrapper channel-padding path.
    B3, C3, L3 = 2, 10, 16
    x3 = jax.random.normal(kx3, (B3, C3, L3), dtype=jnp.float32)
    out3 = jax.block_until_ready(
        eca_attention_1d(x3, weight, bias, kernel_size=kernel_size))
    ref3 = _reference(x3, weight, bias, kernel_size)
    assert out3.shape == (B3, C3, L3)
    assert jnp.allclose(out3, ref3, atol=1e-5, rtol=1e-5)

    print("KERNEL_OK")
</pallas_src>

<mosaic_0001>
module attributes {stable_mosaic.version = 11 : i64} {
  func.func @_eca_kernel(%arg0: i32, %arg1: i32, %arg2: memref<1x3xf32, #tpu.memory_space<smem>>, %arg3: memref<1x1xf32, #tpu.memory_space<smem>>, %arg4: memref<1x8x16xf32, #tpu.memory_space<vmem>>, %arg5: memref<1x8x16xf32, #tpu.memory_space<vmem>>, %arg6: memref<1x8x16xf32, #tpu.memory_space<vmem>>, %arg7: memref<1x8x16xf32, #tpu.memory_space<vmem>>) attributes {dimension_semantics = [#tpu.dimension_semantics<parallel>, #tpu.dimension_semantics<parallel>], iteration_bounds = array<i64: 2, 1>, scalar_prefetch = 0 : i64, scratch_operands = 0 : i64, tpu.core_type = #tpu.core_type<tc>, window_params = [{transform_indices = @transform_0, window_bounds = array<i64: 1, 3>}, {transform_indices = @transform_1, window_bounds = array<i64: 1, 1>}, {transform_indices = @transform_2, window_bounds = array<i64: 1, 8, 16>}, {transform_indices = @transform_3, window_bounds = array<i64: 1, 8, 16>}, {transform_indices = @transform_4, window_bounds = array<i64: 1, 8, 16>}, {transform_indices = @transform_5, window_bounds = array<i64: 1, 8, 16>}]} {
    %c0 = arith.constant 0 : index
    %c0_0 = arith.constant 0 : index
    %c0_1 = arith.constant 0 : index
    %0 = vector.load %arg4[%c0, %c0_0, %c0_1] : memref<1x8x16xf32, #tpu.memory_space<vmem>>, vector<1x8x16xf32>
    %cst = arith.constant dense<0.000000e+00> : vector<1x8xf32>
    %1 = vector.multi_reduction <add>, %0, %cst [2] : vector<1x8x16xf32> to vector<1x8xf32>
    %2 = vector.shape_cast %1 : vector<1x8xf32> to vector<1x8x1xf32>
    %cst_2 = arith.constant 1.600000e+01 : f32
    %3 = vector.broadcast %cst_2 : f32 to vector<1x8x1xf32>
    %4 = arith.divf %2, %3 : vector<1x8x1xf32>
    %c0_3 = arith.constant 0 : index
    %c0_4 = arith.constant 0 : index
    %c0_5 = arith.constant 0 : index
    %5 = vector.load %arg5[%c0_3, %c0_4, %c0_5] : memref<1x8x16xf32, #tpu.memory_space<vmem>>, vector<1x8x16xf32>
    %cst_6 = arith.constant dense<0.000000e+00> : vector<1x8xf32>
    %6 = vector.multi_reduction <add>, %5, %cst_6 [2] : vector<1x8x16xf32> to vector<1x8xf32>
    %7 = vector.shape_cast %6 : vector<1x8xf32> to vector<1x8x1xf32>
    %cst_7 = arith.constant 1.600000e+01 : f32
    %8 = vector.broadcast %cst_7 : f32 to vector<1x8x1xf32>
    %9 = arith.divf %7, %8 : vector<1x8x1xf32>
    %c0_8 = arith.constant 0 : index
    %c0_9 = arith.constant 0 : index
    %c0_10 = arith.constant 0 : index
    %10 = vector.load %arg6[%c0_8, %c0_9, %c0_10] : memref<1x8x16xf32, #tpu.memory_space<vmem>>, vector<1x8x16xf32>
    %cst_11 = arith.constant dense<0.000000e+00> : vector<1x8xf32>
    %11 = vector.multi_reduction <add>, %10, %cst_11 [2] : vector<1x8x16xf32> to vector<1x8xf32>
    %12 = vector.shape_cast %11 : vector<1x8xf32> to vector<1x8x1xf32>
    %cst_12 = arith.constant 1.600000e+01 : f32
    %13 = vector.broadcast %cst_12 : f32 to vector<1x8x1xf32>
    %14 = arith.divf %12, %13 : vector<1x8x1xf32>
    %c0_i32 = arith.constant 0 : i32
    %15 = arith.cmpi sgt, %arg1, %c0_i32 : i32
    %cst_13 = arith.constant 0.000000e+00 : f32
    %16 = vector.broadcast %cst_13 : f32 to vector<1x8x1xf32>
    %17 = arith.select %15, %9, %16 : vector<1x8x1xf32>
    %c0_i32_14 = arith.constant 0 : i32
    %18 = arith.cmpi slt, %arg1, %c0_i32_14 : i32
    %cst_15 = arith.constant 0.000000e+00 : f32
    %19 = vector.broadcast %cst_15 : f32 to vector<1x8x1xf32>
    %20 = arith.select %18, %14, %19 : vector<1x8x1xf32>
    %21 = tpu.concatenate %17, %4, %20 in 1 : vector<1x8x1xf32>, vector<1x8x1xf32>, vector<1x8x1xf32> -> vector<1x24x1xf32>
    %cst_16 = arith.constant 0.000000e+00 : f32
    %22 = vector.broadcast %cst_16 : f32 to vector<1x8x1xf32>
    %c0_17 = arith.constant 0 : index
    %c0_18 = arith.constant 0 : index
    %23 = memref.load %arg3[%c0_17, %c0_18] : memref<1x1xf32, #tpu.memory_space<smem>>
    %24 = vector.broadcast %23 : f32 to vector<1x8x1xf32>
    %25 = arith.addf %22, %24 : vector<1x8x1xf32>
    %c0_19 = arith.constant 0 : index
    %c0_20 = arith.constant 0 : index
    %26 = memref.load %arg2[%c0_19, %c0_20] : memref<1x3xf32, #tpu.memory_space<smem>>
    %27 = vector.extract_strided_slice %21 {offsets = [0, 7, 0], sizes = [1, 8, 1], strides = [1, 1, 1]} : vector<1x24x1xf32> to vector<1x8x1xf32>
    %28 = vector.broadcast %26 : f32 to vector<1x8x1xf32>
    %29 = arith.mulf %28, %27 : vector<1x8x1xf32>
    %30 = arith.addf %25, %29 : vector<1x8x1xf32>
    %c0_21 = arith.constant 0 : index
    %c1 = arith.constant 1 : index
    %31 = memref.load %arg2[%c0_21, %c1] : memref<1x3xf32, #tpu.memory_space<smem>>
    %32 = vector.extract_strided_slice %21 {offsets = [0, 8, 0], sizes = [1, 8, 1], strides = [1, 1, 1]} : vector<1x24x1xf32> to vector<1x8x1xf32>
    %33 = vector.broadcast %31 : f32 to vector<1x8x1xf32>
    %34 = arith.mulf %33, %32 : vector<1x8x1xf32>
    %35 = arith.addf %30, %34 : vector<1x8x1xf32>
    %c0_22 = arith.constant 0 : index
    %c2 = arith.constant 2 : index
    %36 = memref.load %arg2[%c0_22, %c2] : memref<1x3xf32, #tpu.memory_space<smem>>
    %37 = vector.extract_strided_slice %21 {offsets = [0, 9, 0], sizes = [1, 8, 1], strides = [1, 1, 1]} : vector<1x24x1xf32> to vector<1x8x1xf32>
    %38 = vector.broadcast %36 : f32 to vector<1x8x1xf32>
    %39 = arith.mulf %38, %37 : vector<1x8x1xf32>
    %40 = arith.addf %35, %39 : vector<1x8x1xf32>
    %41 = arith.negf %40 : vector<1x8x1xf32>
    %42 = math.exp %41 : vector<1x8x1xf32>
    %cst_23 = arith.constant 1.000000e+00 : f32
    %43 = vector.broadcast %cst_23 : f32 to vector<1x8x1xf32>
    %44 = arith.addf %43, %42 : vector<1x8x1xf32>
    %45 = arith.divf %43, %44 : vector<1x8x1xf32>
    %46 = vector.broadcast %45 : vector<1x8x1xf32> to vector<1x8x16xf32>
    %47 = arith.mulf %0, %46 : vector<1x8x16xf32>
    %c0_24 = arith.constant 0 : index
    %c0_25 = arith.constant 0 : index
    %c0_26 = arith.constant 0 : index
    %48 = vector.load %arg7[%c0_24, %c0_25, %c0_26] : memref<1x8x16xf32, #tpu.memory_space<vmem>>, vector<1x8x16xf32>
    tpu.vector_store %arg7[%c0_24, %c0_25, %c0_26], %47 {strides = array<i32>} : memref<1x8x16xf32, #tpu.memory_space<vmem>>, vector<1x8x16xf32>,
    return
  }
  func.func @transform_0(%arg0: i32, %arg1: i32) -> (i32, i32) {
    %c0_i32 = arith.constant 0 : i32
    %c0_i32_0 = arith.constant 0 : i32
    %c0_i32_1 = arith.constant 0 : i32
    return %c0_i32, %c0_i32_0 : i32, i32
  }
  func.func @transform_1(%arg0: i32, %arg1: i32) -> (i32, i32) {
    %c0_i32 = arith.constant 0 : i32
    %c0_i32_0 = arith.constant 0 : i32
    %c0_i32_1 = arith.constant 0 : i32
    return %c0_i32, %c0_i32_0 : i32, i32
  }
  func.func @transform_2(%arg0: i32, %arg1: i32) -> (i32, i32, i32) {
    %c0_i32 = arith.constant 0 : i32
    %c0_i32_0 = arith.constant 0 : i32
    return %arg0, %arg1, %c0_i32 : i32, i32, i32
  }
  func.func @transform_3(%arg0: i32, %arg1: i32) -> (i32, i32, i32) {
    %c1_i32 = arith.constant 1 : i32
    %0 = arith.muli %arg1, %c1_i32 : i32
    %c1_i32_0 = arith.constant 1 : i32
    %1 = arith.subi %0, %c1_i32_0 : i32
    %c0_i32 = arith.constant 0 : i32
    %2 = arith.maxsi %1, %c0_i32 : i32
    %c0_i32_1 = arith.constant 0 : i32
    %c0_i32_2 = arith.constant 0 : i32
    return %arg0, %2, %c0_i32_1 : i32, i32, i32
  }
  func.func @transform_4(%arg0: i32, %arg1: i32) -> (i32, i32, i32) {
    %c1_i32 = arith.constant 1 : i32
    %0 = arith.addi %arg1, %c1_i32 : i32
    %c1_i32_0 = arith.constant 1 : i32
    %1 = arith.muli %0, %c1_i32_0 : i32
    %c0_i32 = arith.constant 0 : i32
    %2 = arith.minsi %1, %c0_i32 : i32
    %c0_i32_1 = arith.constant 0 : i32
    %c0_i32_2 = arith.constant 0 : i32
    return %arg0, %2, %c0_i32_1 : i32, i32, i32
  }
  func.func @transform_5(%arg0: i32, %arg1: i32) -> (i32, i32, i32) {
    %c0_i32 = arith.constant 0 : i32
    %c0_i32_0 = arith.constant 0 : i32
    return %arg0, %arg1, %c0_i32 : i32, i32, i32
  }
}

</mosaic_0001>

<llo_original>
// kernel: tpu_custom_call.1
$region0: #{tpu_custom_call.1}
  #allocation0 [shape = 'u32[]', space=smem, size = 0x4, offset = 0x4, fixed_abs, tag = 'smem constant byte address 0x4 - core index']
  #allocation1 [shape = 'u32[144,128]{1,0:T(1,128)}', space=vmem, size = 0x12000, scoped, tag = 'internal scratch']
  #allocation2 [shape = 'f32[1,1]{1,0:T(1,128)S(6)}', space=smem, size = 0x200, scoped, tag = 'scoped memory for tpu_custom_call.1']
  %s0 = inlined_call_operand.vmem [shape: f32[1,3], index: 0, kind: input, shape index: {}]
  %s1 = inlined_call_operand.<no memory space> [shape: f32[1,1], index: 1, kind: input, shape index: {}]
  %s2 = inlined_call_operand.hbm [shape: f32[2,8,16], index: 2, kind: input, shape index: {}]
  %s3 = inlined_call_operand.hbm [shape: f32[2,8,16], index: 3, kind: input, shape index: {}]
  %s4 = inlined_call_operand.hbm [shape: f32[2,8,16], index: 4, kind: input, shape index: {}]
  %s5 = inlined_call_operand.hbm [shape: f32[2,8,16], index: 5, kind: output, shape index: {}]
  %s6 = sld [smem:[#allocation0]]
  $region69: #{tpu_custom_call.1} parent=0
    _
  %s8 = ssub.s32 1, %s6
  %s9 = scalar_select 0, %s8, %s6
  %10 = sst [smem:[#allocation2]] %s1
  $region1: #{tpu_custom_call.1} parent=0
    #allocation3 [shape = 'u8[512]{0}', space=smem, size = 0x200, scoped, tag = 'input window, operand 0, single buffered']
    #allocation4 [shape = 's32[2]{0}', space=sflag, size = 0x8, scoped, tag = 'scoped memory for tpu_custom_call.1']
    #allocation5 [shape = 's32[2]{0}', space=sflag, size = 0x8, scoped, tag = 'scoped memory for tpu_custom_call.1']
    #allocation6 [shape = 's32[2]{0}', space=sflag, size = 0x8, scoped, tag = 'scoped memory for tpu_custom_call.1']
    #allocation7 [shape = 'u8[8192]{0}', space=vmem, size = 0x2000, scoped, tag = 'input window, operand 2']
    #allocation8 [shape = 'u8[8192]{0}', space=vmem, size = 0x2000, scoped, tag = 'input window, operand 3']
    #allocation9 [shape = 's32[2]{0}', space=sflag, size = 0x8, scoped, tag = 'scoped memory for tpu_custom_call.1']
    #allocation10 [shape = 'u8[8192]{0}', space=vmem, size = 0x2000, scoped, tag = 'input window, operand 4']
    #allocation11 [shape = 'u8[8192]{0}', space=vmem, size = 0x2000, scoped, tag = 'output window, operand 0']
    %11 = vsyncpa [#allocation6], 0
    %12 = vsyncpa [#allocation4], 0
    %s13 = scalar_lea.sflag [#allocation4], 1
    %14 = vsyncpa %s13, 0
    %15 = vsyncpa [#allocation9], 0
    %s16 = scalar_lea.sflag [#allocation9], 1
    %17 = vsyncpa %s16, 0
    %18 = vsyncpa [#allocation5], 0
    %s19 = scalar_lea.sflag [#allocation5], 1
    %20 = vsyncpa %s19, 0
    loop: start=0, step=1, limit=4
    $region2: #{tpu_custom_call.1} parent=1 // loop_pre_header
      _
    $region3: #{tpu_custom_call.1} parent=1 // loop_header
      %s22 = sphi 0, %s26
      %p23 = scmp.ge.s32.totalorder %s22, 4
      %s29 = sphi 0, %s41
      %s30 = sphi 0, %s37
      %s31 = sphi 0, %s29
      %s32 = sphi 0, %s30
      %s33 = sphi 0, %s31
      %s34 = sphi 0, %s32
      %s42 = sphi 0, %s42
      %s44 = sphi 0, %s42
      %s45 = sphi 0, %s44
      %s59 = sphi 0, %s45
      %s63 = sphi 0, %s63
      %s65 = sphi 0, %s63
      %s66 = sphi 0, %s65
      %s80 = sphi 0, %s66
      %s88 = sphi 0, %s90
      %s91 = sphi 0, %s88
      %s92 = sphi 0, %s91
      %s108 = sphi 0, %s92
      %s122 = sphi 0, %s124
      %s125 = sphi 0, %s122
      %s126 = sphi 0, %s125
      %s142 = sphi 0, %s126
      %s156 = sphi 0, %s158
      %s159 = sphi 0, %s156
      %s160 = sphi 0, %s159
      %s176 = sphi 0, %s160
      %s184 = sphi 0, %s186
      %s187 = sphi 0, %s184
      %s188 = sphi 0, %s187
      %s204 = sphi 0, %s188
    $region4: #{tpu_custom_call.1} parent=1 // loop_header_branch
      %25 = sbr.rel (%p23) target = $region8
    $region5: #{tpu_custom_call.1} parent=1 // loop_body
      %s27 = ssub.s32 %s22, 1
      %s28 = ssub.s32 %s22, 2
      %s35 = sadd.s32 1, %s30
      %p36 = scmp.ge.s32.totalorder %s35, 1
      %s37 = scalar_select %p36, 0, %s35
      %s38 = sadd.s32 1, %s29
      %s39 = scalar_select %p36, %s38, %s29
      %p40 = scmp.ge.s32.totalorder %s39, 2
      %s41 = scalar_select %p40, 0, %s39
      %s43 = sadd.s32 %s42, 1
      %p46 = scmp.eq.s32.totalorder %s22, 1
      %p47 = scmp.ne.s32.totalorder %s42, %s44
      %p48 = scmp.eq.s32.totalorder %s22, 0
      %p49 = por %p47, %p48
      %p50 = scmp.ne.s32.totalorder %s42, %s44
      %p51 = scmp.eq.s32.totalorder %s27, 1
      %p52 = por %p50, %p51
      %p53 = scmp.ne.s32.totalorder %s44, %s45
      %p54 = scmp.eq.s32.totalorder %s27, 0
      %p55 = por %p53, %p54
      %p56 = scmp.ne.s32.totalorder %s44, %s45
      %p57 = scmp.eq.s32.totalorder %s28, 1
      %p58 = por %p56, %p57
      %p60 = scmp.ne.s32.totalorder %s45, %s59
      %p61 = scmp.eq.s32.totalorder %s28, 0
      %p62 = por %p60, %p61
      %s64 = sadd.s32 %s63, 1
      %p67 = scmp.eq.s32.totalorder %s22, 1
      %p68 = scmp.ne.s32.totalorder %s63, %s65
      %p69 = scmp.eq.s32.totalorder %s22, 0
      %p70 = por %p68, %p69
      %p71 = scmp.ne.s32.totalorder %s63, %s65
      %p72 = scmp.eq.s32.totalorder %s27, 1
      %p73 = por %p71, %p72
      %p74 = scmp.ne.s32.totalorder %s65, %s66
      %p75 = scmp.eq.s32.totalorder %s27, 0
      %p76 = por %p74, %p75
      %p77 = scmp.ne.s32.totalorder %s65, %s66
      %p78 = scmp.eq.s32.totalorder %s28, 1
      %p79 = por %p77, %p78
      %p81 = scmp.ne.s32.totalorder %s66, %s80
      %p82 = scmp.eq.s32.totalorder %s28, 0
      %p83 = por %p81, %p82
      %s84 = ssub.s32 %s29, %s41
      %s85 = ssub.s32 %s30, %s37
      %s86 = sor.u32 %s84, %s85
      %p87 = scmp.eq.s32.totalorder %s86, 0
      %s89 = sadd.s32 %s88, 1
      %s90 = scalar_select %p87, %s88, %s89
      %p93 = pneg %p87
      %p94 = scmp.eq.s32.totalorder %s22, 1
      %p95 = por %p93, %p94
      %p96 = scmp.ne.s32.totalorder %s88, %s91
      %p97 = scmp.eq.s32.totalorder %s22, 0
      %p98 = por %p96, %p97
      %p99 = scmp.ne.s32.totalorder %s88, %s91
      %p100 = scmp.eq.s32.totalorder %s27, 1
      %p101 = por %p99, %p100
      %p102 = scmp.ne.s32.totalorder %s91, %s92
      %p103 = scmp.eq.s32.totalorder %s27, 0
      %p104 = por %p102, %p103
      %p105 = scmp.ne.s32.totalorder %s91, %s92
      %p106 = scmp.eq.s32.totalorder %s28, 1
      %p107 = por %p105, %p106
      %p109 = scmp.ne.s32.totalorder %s92, %s108
      %p110 = scmp.eq.s32.totalorder %s28, 0
      %p111 = por %p109, %p110
      %s112 = ssub.s32 %s30, 1
      %p113 = scmp.gt.s32.totalorder %s112, 0
      %s114 = scalar_select %p113, %s112, 0
      %s115 = ssub.s32 %s37, 1
      %p116 = scmp.gt.s32.totalorder %s115, 0
      %s117 = scalar_select %p116, %s115, 0
      %s118 = ssub.s32 %s29, %s41
      %s119 = ssub.s32 %s114, %s117
      %s120 = sor.u32 %s118, %s119
      %p121 = scmp.eq.s32.totalorder %s120, 0
      %s123 = sadd.s32 %s122, 1
      %s124 = scalar_select %p121, %s122, %s123
      %p127 = pneg %p121
      %p128 = scmp.eq.s32.totalorder %s22, 1
      %p129 = por %p127, %p128
      %p130 = scmp.ne.s32.totalorder %s122, %s125
      %p131 = scmp.eq.s32.totalorder %s22, 0
      %p132 = por %p130, %p131
      %p133 = scmp.ne.s32.totalorder %s122, %s125
      %p134 = scmp.eq.s32.totalorder %s27, 1
      %p135 = por %p133, %p134
      %p136 = scmp.ne.s32.totalorder %s125, %s126
      %p137 = scmp.eq.s32.totalorder %s27, 0
      %p138 = por %p136, %p137
      %p139 = scmp.ne.s32.totalorder %s125, %s126
      %p140 = scmp.eq.s32.totalorder %s28, 1
      %p141 = por %p139, %p140
      %p143 = scmp.ne.s32.totalorder %s126, %s142
      %p144 = scmp.eq.s32.totalorder %s28, 0
      %p145 = por %p143, %p144
      %s146 = sadd.s32 %s30, 1
      %p147 = scmp.lt.s32.totalorder %s146, 0
      %s148 = scalar_select %p147, %s146, 0
      %s149 = sadd.s32 %s37, 1
      %p150 = scmp.lt.s32.totalorder %s149, 0
      %s151 = scalar_select %p150, %s149, 0
      %s152 = ssub.s32 %s29, %s41
      %s153 = ssub.s32 %s148, %s151
      %s154 = sor.u32 %s152, %s153
      %p155 = scmp.eq.s32.totalorder %s154, 0
      %s157 = sadd.s32 %s156, 1
      %s158 = scalar_select %p155, %s156, %s157
      %p161 = pneg %p155
      %p162 = scmp.eq.s32.totalorder %s22, 1
      %p163 = por %p161, %p162
      %p164 = scmp.ne.s32.totalorder %s156, %s159
      %p165 = scmp.eq.s32.totalorder %s22, 0
      %p166 = por %p164, %p165
      %p167 = scmp.ne.s32.totalorder %s156, %s159
      %p168 = scmp.eq.s32.totalorder %s27, 1
      %p169 = por %p167, %p168
      %p170 = scmp.ne.s32.totalorder %s159, %s160
      %p171 = scmp.eq.s32.totalorder %s27, 0
      %p172 = por %p170, %p171
      %p173 = scmp.ne.s32.totalorder %s159, %s160
      %p174 = scmp.eq.s32.totalorder %s28, 1
      %p175 = por %p173, %p174
      %p177 = scmp.ne.s32.totalorder %s160, %s176
      %p178 = scmp.eq.s32.totalorder %s28, 0
      %p179 = por %p177, %p178
      %s180 = ssub.s32 %s29, %s41
      %s181 = ssub.s32 %s30, %s37
      %s182 = sor.u32 %s180, %s181
      %p183 = scmp.eq.s32.totalorder %s182, 0
      %s185 = sadd.s32 %s184, 1
      %s186 = scalar_select %p183, %s184, %s185
      %p189 = pneg %p183
      %p190 = scmp.eq.s32.totalorder %s22, 1
      %p191 = por %p189, %p190
      %p192 = scmp.ne.s32.totalorder %s184, %s187
      %p193 = scmp.eq.s32.totalorder %s22, 0
      %p194 = por %p192, %p193
      %p195 = scmp.ne.s32.totalorder %s184, %s187
      %p196 = scmp.eq.s32.totalorder %s27, 1
      %p197 = por %p195, %p196
      %p198 = scmp.ne.s32.totalorder %s187, %s188
      %p199 = scmp.eq.s32.totalorder %s27, 0
      %p200 = por %p198, %p199
      %p201 = scmp.ne.s32.totalorder %s187, %s188
      %p202 = scmp.eq.s32.totalorder %s28, 1
      %p203 = por %p201, %p202
      %p205 = scmp.ne.s32.totalorder %s188, %s204
      %p206 = scmp.eq.s32.totalorder %s28, 0
      %p207 = por %p205, %p206
      %p208 = scmp.le.s32.totalorder 1, %s22
      %p209 = scmp.lt.s32.totalorder %s22, 3
      %p210 = pnand %p208, %p209
      %p211 = pneg %p210
      // Predicated region
      $region9: #{tpu_custom_call.1} parent=5 // pred_check
        _
      $region10: #{tpu_custom_call.1} parent=5 // pred_check_branch
        %213 = sbr.rel (%p210) target = $region12
      $region11: #{tpu_custom_call.1} parent=5 // pred_region
        %s214 = ssub.s32 %s22, 1
        // Predicated region
        $region13: #{tpu_custom_call.1} parent=11 // pred_check
          %p215 = pneg %p55
        $region14: #{tpu_custom_call.1} parent=11 // pred_check_branch
          %217 = sbr.rel (%p215) target = $region16
        $region15: #{tpu_custom_call.1} parent=11 // pred_region
          %s219 = ssub.s32 16, 16
          %220 = vsyncadd [#allocation6], %s219
          %s222 = sshll.u32 %s0, 4
          %s223 = int_to_ptr.vmem [resolvable:$true] %s222
          %225 = dma.vmem_to_smem %s223, 16, [#allocation3], [#allocation6]
        $region16: #{tpu_custom_call.1} parent=11 // pred_fallthru
          _
        // Predicated region
        $region17: #{tpu_custom_call.1} parent=11 // pred_check
          %p226 = pneg %p76
        $region18: #{tpu_custom_call.1} parent=11 // pred_check_branch
          %228 = sbr.rel (%p226) target = $region20
        $region19: #{tpu_custom_call.1} parent=11 // pred_region
          _
        $region20: #{tpu_custom_call.1} parent=11 // pred_fallthru
          _
      $region12: #{tpu_custom_call.1} parent=5 // pred_fallthru
        _
      %p229 = scmp.lt.s32.totalorder %s22, 2
      // Predicated region
      $region21: #{tpu_custom_call.1} parent=5 // pred_check
        %p230 = pneg %p229
      $region22: #{tpu_custom_call.1} parent=5 // pred_check_branch
        %232 = sbr.rel (%p230) target = $region24
      $region23: #{tpu_custom_call.1} parent=5 // pred_region
        // Predicated region
        $region25: #{tpu_custom_call.1} parent=23 // pred_check
          %p233 = pneg %p98
        $region26: #{tpu_custom_call.1} parent=23 // pred_check_branch
          %235 = sbr.rel (%p233) target = $region28
        $region27: #{tpu_custom_call.1} parent=23 // pred_region
          %s236 = sand.u32 %s88, 1
          %s237 = scalar_lea.sflag [#allocation4], %s236
          %s238 = sand.u32 %s88, 1
          %s239 = smul.addr %s238, 8
          %s240 = scalar_lea.vmem [#allocation7], %s239
          %s242 = ssub.s32 128, 128
          %243 = vsyncadd %s237, %s242
          %s244 = sadd.s32 %s30, %s29
          %s245 = smul.addr %s244, 128
          %s246 = scalar_lea.hbm %s2, %s245
          %s248 = sshll.u32 %s240, 4
          %s249 = int_to_ptr.vmem [resolvable:$true] %s248
          %251 = dma.hbm_to_vmem [thread:$0]  %s246, 128, %s249, %s237
        $region28: #{tpu_custom_call.1} parent=23 // pred_fallthru
          _
        // Predicated region
        $region29: #{tpu_custom_call.1} parent=23 // pred_check
          %p252 = pneg %p132
        $region30: #{tpu_custom_call.1} parent=23 // pred_check_branch
          %254 = sbr.rel (%p252) target = $region32
        $region31: #{tpu_custom_call.1} parent=23 // pred_region
          %s255 = sand.u32 %s22, 1
          %s256 = scalar_lea.sflag [#allocation9], %s255
          %s257 = sand.u32 %s122, 1
          %s258 = smul.addr %s257, 8
          %s259 = scalar_lea.vmem [#allocation8], %s258
          %s260 = ssub.s32 %s30, 1
          %p261 = scmp.gt.s32.totalorder %s260, 0
          %s262 = scalar_select %p261, %s260, 0
          %s264 = ssub.s32 128, 128
          %265 = vsyncadd %s256, %s264
          %s266 = sadd.s32 %s262, %s29
          %s267 = smul.addr %s266, 128
          %s268 = scalar_lea.hbm %s3, %s267
          %s270 = sshll.u32 %s259, 4
          %s271 = int_to_ptr.vmem [resolvable:$true] %s270
          %273 = dma.hbm_to_vmem [thread:$0]  %s268, 128, %s271, %s256
        $region32: #{tpu_custom_call.1} parent=23 // pred_fallthru
          _
        // Predicated region
        $region33: #{tpu_custom_call.1} parent=23 // pred_check
          %p274 = pneg %p166
        $region34: #{tpu_custom_call.1} parent=23 // pred_check_branch
          %276 = sbr.rel (%p274) target = $region36
        $region35: #{tpu_custom_call.1} parent=23 // pred_region
          %s277 = sand.u32 %s22, 1
          %s278 = scalar_lea.sflag [#allocation9], %s277
          %s279 = sand.u32 %s156, 1
          %s280 = smul.addr %s279, 8
          %s281 = scalar_lea.vmem [#allocation10], %s280
          %s282 = sadd.s32 %s30, 1
          %p283 = scmp.lt.s32.totalorder %s282, 0
          %s284 = scalar_select %p283, %s282, 0
          %s286 = ssub.s32 128, 128
          %287 = vsyncadd %s278, %s286
          %s288 = sadd.s32 %s284, %s29
          %s289 = smul.addr %s288, 128
          %s290 = scalar_lea.hbm %s4, %s289
          %s292 = sshll.u32 %s281, 4
          %s293 = int_to_ptr.vmem [resolvable:$true] %s292
          %295 = dma.hbm_to_vmem [thread:$0]  %s290, 128, %s293, %s278
        $region36: #{tpu_custom_call.1} parent=23 // pred_fallthru
          _
      $region24: #{tpu_custom_call.1} parent=5 // pred_fallthru
        _
      %p296 = scmp.le.s32.totalorder 1, %s22
      %p297 = scmp.lt.s32.totalorder %s22, 3
      %p298 = pnand %p296, %p297
      %p299 = pneg %p298
      // Predicated region
      $region37: #{tpu_custom_call.1} parent=5 // pred_check
        _
      $region38: #{tpu_custom_call.1} parent=5 // pred_check_branch
        %301 = sbr.rel (%p298) target = $region40
      $region39: #{tpu_custom_call.1} parent=5 // pred_region
        %s302 = ssub.s32 %s22, 1
        // Predicated region
        $region41: #{tpu_custom_call.1} parent=39 // pred_check
          %p303 = pneg %p55
        $region42: #{tpu_custom_call.1} parent=39 // pred_check_branch
          %305 = sbr.rel (%p303) target = $region44
        $region43: #{tpu_custom_call.1} parent=39 // pred_region
          %306 = dma.done [#allocation6], 16
        $region44: #{tpu_custom_call.1} parent=39 // pred_fallthru
          _
        %s307 = sand.u32 %s91, 1
        %s308 = scalar_lea.sflag [#allocation4], %s307
        %s309 = sand.u32 %s91, 1
        %s310 = smul.addr %s309, 8
        %s311 = scalar_lea.vmem [#allocation7], %s310
        // Predicated region
        $region45: #{tpu_custom_call.1} parent=39 // pred_check
          %p312 = pneg %p104
        $region46: #{tpu_custom_call.1} parent=39 // pred_check_branch
          %314 = sbr.rel (%p312) target = $region48
        $region47: #{tpu_custom_call.1} parent=39 // pred_region
          %315 = dma.done %s308, 128
        $region48: #{tpu_custom_call.1} parent=39 // pred_fallthru
          _
        %s316 = sand.u32 %s27, 1
        %s317 = scalar_lea.sflag [#allocation9], %s316
        %s318 = sand.u32 %s125, 1
        %s319 = smul.addr %s318, 8
        %s320 = scalar_lea.vmem [#allocation8], %s319
        // Predicated region
        $region49: #{tpu_custom_call.1} parent=39 // pred_check
          %p321 = pneg %p138
        $region50: #{tpu_custom_call.1} parent=39 // pred_check_branch
          %323 = sbr.rel (%p321) target = $region52
        $region51: #{tpu_custom_call.1} parent=39 // pred_region
          %324 = dma.done %s317, 128
        $region52: #{tpu_custom_call.1} parent=39 // pred_fallthru
          _
        %s325 = sand.u32 %s27, 1
        %s326 = scalar_lea.sflag [#allocation9], %s325
        %s327 = sand.u32 %s159, 1
        %s328 = smul.addr %s327, 8
        %s329 = scalar_lea.vmem [#allocation10], %s328
        // Predicated region
        $region53: #{tpu_custom_call.1} parent=39 // pred_check
          %p330 = pneg %p172
        $region54: #{tpu_custom_call.1} parent=39 // pred_check_branch
          %332 = sbr.rel (%p330) target = $region56
        $region55: #{tpu_custom_call.1} parent=39 // pred_region
          %333 = dma.done %s326, 128
        $region56: #{tpu_custom_call.1} parent=39 // pred_fallthru
          _
        %334 = sfence
        %p335 = pneg %p55
        %p336 = pneg %p52
        %p337 = pneg %p76
        %p338 = pneg %p73
        %s339 = sand.u32 %s91, 1
        %s340 = scalar_lea.sflag [#allocation4], %s339
        %s341 = sand.u32 %s91, 1
        %s342 = smul.addr %s341, 8
        %s343 = scalar_lea.vmem [#allocation7], %s342
        %p344 = pneg %p104
        %p345 = pneg %p101
        %s346 = sand.u32 %s27, 1
        %s347 = scalar_lea.sflag [#allocation9], %s346
        %s348 = sand.u32 %s125, 1
        %s349 = smul.addr %s348, 8
        %s350 = scalar_lea.vmem [#allocation8], %s349
        %p351 = pneg %p138
        %p352 = pneg %p135
        %s353 = sand.u32 %s27, 1
        %s354 = scalar_lea.sflag [#allocation9], %s353
        %s355 = sand.u32 %s159, 1
        %s356 = smul.addr %s355, 8
        %s357 = scalar_lea.vmem [#allocation10], %s356
        %p358 = pneg %p172
        %p359 = pneg %p169
        %p360 = pneg %p200
        %p361 = pneg %p197
        %s362 = sand.u32 %s187, 1
        %s363 = scalar_lea.sflag [#allocation5], %s362
        %s364 = sand.u32 %s187, 1
        %s365 = smul.addr %s364, 8
        %s366 = scalar_lea.vmem [#allocation11], %s365
        %s367 = ssub.s32 %s32, 1
        %p368 = scmp.gt.s32.totalorder %s367, 0
        %s369 = scalar_select %p368, %s367, 0
        %s370 = sadd.s32 %s32, 1
        %p371 = scmp.lt.s32.totalorder %s370, 0
        %s372 = scalar_select %p371, %s370, 0
        %v373 = vld [vmem:[%s311] sm:$0xff]
        %vm374 = vcmask 130048
        %v375 = vsel %vm374, %v373, 0.0
        %376 = vadd.xlane.f32.xlu0 %v375
        %v377 = vpop.xlane.xlu0 %376
        %v378 = vrcp.pop 16.0
        %v379 = vmul.f32 %v377, %v378
        %v380 = vld [vmem:[%s320] sm:$0xff]
        %v381 = vsel %vm374, %v380, 0.0
        %382 = vadd.xlane.f32.xlu0 %v381
        %v383 = vpop.xlane.xlu0 %382
        %v384 = vmul.f32 %v383, %v378
        %v385 = vld [vmem:[%s329] sm:$0xff]
        %v386 = vsel %vm374, %v385, 0.0
        %387 = vadd.xlane.f32.xlu0 %v386
        %v388 = vpop.xlane.xlu0 %387
        %v389 = vmul.f32 %v388, %v378
        %p390 = scmp.gt.s32.totalorder %s32, 0
        %s391 = scalar_select %p390, 1, 0
        %v392 = vstv %s391
        %vm393 = vcmp.eq.s32.totalorder %v392, 1
        %v394 = vsel %vm393, %v384, 0.0
        %p395 = scmp.lt.s32.totalorder %s32, 0
        %s396 = scalar_select %p395, 1, 0
        %v397 = vstv %s396
        %vm398 = vcmp.eq.s32.totalorder %v397, 1
        %v399 = vsel %vm398, %v389, 0.0
        %s400 = sld [smem:[#allocation2]]
        %v401 = vstv %s400
        %v402 = vadd.f32 %v401, 0.0
        %s403 = sld [smem:[#allocation3]]
        %v404 = vstv %s403
        %v405 = vmul.f32 %v404, %v394
        %v406 = vmul.f32 %v404, %v379
        %v407 = vadd.f32 %v402, %v405
        %v408 = vadd.f32 %v402, %v406
        %s409 = sld [smem:[#allocation3 + $0x1]]
        %v410 = vstv %s409
        %v411 = vmul.f32 %v410, %v379
        %v413 = vrot.slane %v411, 1
        %v415 = vadd.f32 %v407, %v413
        %v416 = vadd.f32 %v408, %v413
        %s417 = sld [smem:[#allocation3 + $0x2]]
        %v418 = vstv %s417
        %v419 = vmul.f32 %v418, %v379
        %v420 = vmul.f32 %v418, %v399
        %vm423 = vcmask 1045504
        %v424 = vrot.slane %v419, 2
        %v425 = vrot.slane %v420, 2
        %v426 = vsel %vm423, %v424, %v425
        %v429 = vadd.f32 %v415, %v424
        %v430 = vadd.f32 %v416, %v426
        %v431 = vxor.u32 %v429, 2147483648
        %v432 = vxor.u32 %v430, 2147483648
        %v433 = vmul.f32 %v431, 1.442695
        %v434 = vpow.pop %v433
        %v435 = vmul.f32 %v432, 1.442695
        %v436 = vpow.pop %v435
        %v437 = vadd.f32 %v434, 1.0
        %v438 = vadd.f32 %v436, 1.0
        %v439 = vrcp.pop %v437
        %v440 = vmul.f32 1.0, %v439
        %v441 = vrcp.pop %v438
        %v442 = vmul.f32 1.0, %v441
        %444 = vset.pattern.permute.xlu0 0
        %445 = vperm.xlu0 %444, %v440
        %v446 = vpop.permute.xlu0 %445
        %448 = vset.pattern.permute.xlu0 0
        %449 = vperm.xlu0 %448, %v442
        %v450 = vpop.permute.xlu0 %449
        %vm451 = vcmask 1040384
        %v452 = vrot.slane %v446, 7
        %v453 = vrot.slane %v450, 7
        %v454 = vsel %vm451, %v452, %v453
        %v456 = vmul.f32 %v373, %v454
        %457 = vst.msk [vmem:[%s366] sm:$0xff] %vm374, %v456
        %s458 = sand.u32 %s187, 1
        %s459 = scalar_lea.sflag [#allocation5], %s458
        %s460 = sand.u32 %s187, 1
        %s461 = smul.addr %s460, 8
        %s462 = scalar_lea.vmem [#allocation11], %s461
        // Predicated region
        $region57: #{tpu_custom_call.1} parent=39 // pred_check
          %p463 = pneg %p197
        $region58: #{tpu_custom_call.1} parent=39 // pred_check_branch
          %465 = sbr.rel (%p463) target = $region60
        $region59: #{tpu_custom_call.1} parent=39 // pred_region
          %s467 = ssub.s32 128, 128
          %468 = vsyncadd %s459, %s467
          %s469 = sadd.s32 %s32, %s31
          %s470 = smul.addr %s469, 128
          %s471 = scalar_lea.hbm %s5, %s470
          %s473 = sshll.u32 %s462, 4
          %s474 = int_to_ptr.vmem [resolvable:$true] %s473
          %476 = dma.vmem_to_hbm [thread:$0]  %s474, 128, %s471, %s459
        $region60: #{tpu_custom_call.1} parent=39 // pred_fallthru
          _
      $region40: #{tpu_custom_call.1} parent=5 // pred_fallthru
        _
      %p477 = scmp.le.s32.totalorder 2, %s22
      // Predicated region
      $region61: #{tpu_custom_call.1} parent=5 // pred_check
        %p478 = pneg %p477
      $region62: #{tpu_custom_call.1} parent=5 // pred_check_branch
        %480 = sbr.rel (%p478) target = $region64
      $region63: #{tpu_custom_call.1} parent=5 // pred_region
        %s481 = ssub.s32 %s22, 2
        // Predicated region
        $region65: #{tpu_custom_call.1} parent=63 // pred_check
          %p482 = pneg %p203
        $region66: #{tpu_custom_call.1} parent=63 // pred_check_branch
          %484 = sbr.rel (%p482) target = $region68
        $region67: #{tpu_custom_call.1} parent=63 // pred_region
          %s485 = sand.u32 %s188, 1
          %s486 = scalar_lea.sflag [#allocation5], %s485
          %s487 = sand.u32 %s188, 1
          %s488 = smul.addr %s487, 8
          %s489 = scalar_lea.vmem [#allocation11], %s488
          %490 = dma.done %s486, 128
        $region68: #{tpu_custom_call.1} parent=63 // pred_fallthru
          _
      $region64: #{tpu_custom_call.1} parent=5 // pred_fallthru
        _
    $region6: #{tpu_custom_call.1} parent=1 // loop_footer
      %s26 = sadd.s32 1, %s22
    $region7: #{tpu_custom_call.1} parent=1 // loop_footer_branch
      %21 = sbr.rel target = $region3
    $region8: #{tpu_custom_call.1} parent=1 // loop_exit
      _
    %491 = vsyncpa [#allocation4], 1
    %s492 = scalar_lea.sflag [#allocation4], 1
    %493 = vsyncpa %s492, 1
    %494 = vsyncpa [#allocation9], 1
    %s495 = scalar_lea.sflag [#allocation9], 1
    %496 = vsyncpa %s495, 1
    %497 = vsyncpa [#allocation5], 1
    %s498 = scalar_lea.sflag [#allocation5], 1
    %499 = vsyncpa %s498, 1
    %500 = vsyncpa [#allocation6], 1
    %s501 = scalar_lea.sflag [#allocation6], 1
    %502 = vsyncpa %s501, 1

</llo_original>
